<compile_context>
chip_gen: v5e
topology: v5e:2x2
jax: 0.10.0
libtpu: 0.0.40
codegen_flags: <defaults>
</compile_context>

<pallas_src>
import jax
import jax.numpy as jnp
from jax.experimental import pallas as pl
from jax.experimental.pallas import tpu as pltpu

NEG_SLOPE = 0.01        # torch.nn.LeakyReLU default
MAX_TILE_B = 4096       # max batch rows per grid step (multiple of 8 sublanes)
MIN_GRID_STEPS = 4      # for large B: keep >=4 steps so v7x megacore + pipelining engage


def _leaky_relu(v):
    return jnp.where(v >= 0, v, NEG_SLOPE * v)


def _round_up(n, m):
    return ((n + m - 1) // m) * m


def _choose_tile(B, max_tile_b):
    """Adaptive batch tile: big tiles, bounded padding overshoot, >=MIN_GRID_STEPS for big B."""
    n_steps = pl.cdiv(B, max_tile_b)
    if B > MIN_GRID_STEPS * 8:
        n_steps = max(n_steps, MIN_GRID_STEPS)
    tile_b = max(8, _round_up(pl.cdiv(B, n_steps), 8))
    tile_b = min(tile_b, _round_up(max_tile_b, 8))
    b_pad = _round_up(B, tile_b)
    return tile_b, b_pad


def densenet_kernel(x_ref, w1_ref, b1_ref, w2_ref, b2_ref, w3_ref, b3_ref, o_ref):
    # Layer 1: Linear(head -> body) + LeakyReLU  (f32 MXU matmul, f32 accumulate)
    h = jnp.dot(x_ref[...], w1_ref[...], preferred_element_type=jnp.float32)
    h = _leaky_relu(h + b1_ref[...])
    # Layer 2: Linear(body -> body) + LeakyReLU
    h = jnp.dot(h, w2_ref[...], preferred_element_type=jnp.float32)
    h = _leaky_relu(h + b2_ref[...])
    # Layer 3: Linear(body -> tail) + LeakyReLU
    h = jnp.dot(h, w3_ref[...], preferred_element_type=jnp.float32)
    o_ref[...] = _leaky_relu(h + b3_ref[...]).astype(o_ref.dtype)


def densenet_forward(x, params, max_tile_b=MAX_TILE_B, dropout=0.0):
    """x: [B, headsize] f32; params: [(W[in,out], b[1,out])]*3 (PyTorch Linear, W transposed)."""
    # TODO(synk): dropout > 0 would need pltpu.prng_seed/prng_random_bits masking in-kernel.
    assert dropout == 0.0, "only the module-default identity dropout (p=0.0) is implemented"
    (w1, b1), (w2, b2), (w3, b3) = params
    B, head = x.shape
    body = w1.shape[1]
    tail = w3.shape[1]

    tile_b, b_pad = _choose_tile(B, max_tile_b)
    grid = (b_pad // tile_b,)

    # Pad the batch dim only when needed (feature dims are streamed at their true width).
    xp = x if b_pad == B else jnp.pad(x, ((0, b_pad - B), (0, 0)))

    x_spec = pl.BlockSpec((tile_b, head), lambda i: (i, 0))
    out_spec = pl.BlockSpec((tile_b, tail), lambda i: (i, 0))
    const = lambda shape: pl.BlockSpec(shape, lambda i: (0, 0))  # VMEM-resident across grid

    flops = 2 * b_pad * (head * body + body * body + body * tail)
    bytes_accessed = 4 * (
        xp.size + w1.size + w2.size + w3.size + b1.size + b2.size + b3.size + b_pad * tail
    )

    out_pad = pl.pallas_call(
        densenet_kernel,
        out_shape=jax.ShapeDtypeStruct((b_pad, tail), jnp.float32),
        grid=grid,
        in_specs=[
            x_spec,
            const(w1.shape), const(b1.shape),
            const(w2.shape), const(b2.shape),
            const(w3.shape), const(b3.shape),
        ],
        out_specs=out_spec,
        compiler_params=pltpu.CompilerParams(dimension_semantics=("parallel",)),
        cost_estimate=pl.CostEstimate(flops=flops, transcendentals=0,
                                      bytes_accessed=bytes_accessed),
    )(xp, w1, b1, w2, b2, w3, b3)

    return out_pad if b_pad == B else out_pad[:B]


def init_params(key, headsize, bodysize, tailsize):
    """Deterministic normal init (stand-in for models.NormalInit on Linear layers)."""
    sizes = [(headsize, bodysize), (bodysize, bodysize), (bodysize, tailsize)]
    params = []
    for i, (fin, fout) in enumerate(sizes):
        kw, kb = jax.random.split(jax.random.fold_in(key, i))
        w = jax.random.normal(kw, (fin, fout), jnp.float32) * 0.05
        b = jax.random.normal(kb, (1, fout), jnp.float32) * 0.05
        params.append((w, b))
    return params


def reference_forward(x, params):
    """Pure-JAX f32 reference (mirrors the PyTorch module forward)."""
    h = x
    for w, b in params:
        h = _leaky_relu(h @ w + b)
    return h


if __name__ == "__main__":
    headsize, bodysize, tailsize = 32, 64, 16
    key = jax.random.PRNGKey(0)
    kx, kp = jax.random.split(key)
    params = init_params(kp, headsize, bodysize, tailsize)

    ok = True
    for B in (8, 10):  # includes a ragged batch to exercise batch padding
        x = jax.random.normal(jax.random.fold_in(kx, B), (B, headsize), jnp.float32)
        out = jax.block_until_ready(densenet_forward(x, params))
        assert out.shape == (B, tailsize)
        ref = reference_forward(x, params)
        ok &= bool(jnp.allclose(out, ref, atol=5e-3, rtol=5e-3))

    assert ok, "mismatch vs JAX reference"
    print("KERNEL_OK")
</pallas_src>

<mosaic_0001>
module attributes {stable_mosaic.version = 11 : i64} {
  func.func @densenet_kernel(%arg0: i32, %arg1: memref<8x32xf32, #tpu.memory_space<vmem>>, %arg2: memref<32x64xf32, #tpu.memory_space<vmem>>, %arg3: memref<1x64xf32, #tpu.memory_space<vmem>>, %arg4: memref<64x64xf32, #tpu.memory_space<vmem>>, %arg5: memref<1x64xf32, #tpu.memory_space<vmem>>, %arg6: memref<64x16xf32, #tpu.memory_space<vmem>>, %arg7: memref<1x16xf32, #tpu.memory_space<vmem>>, %arg8: memref<8x16xf32, #tpu.memory_space<vmem>>) attributes {dimension_semantics = [#tpu.dimension_semantics<parallel>], iteration_bounds = array<i64: 1>, scalar_prefetch = 0 : i64, scratch_operands = 0 : i64, tpu.core_type = #tpu.core_type<tc>, window_params = [{transform_indices = @transform_0, window_bounds = array<i64: 8, 32>}, {pipeline_mode = #tpu.pipeline_mode<synchronous>, transform_indices = @transform_1, window_bounds = array<i64: 32, 64>}, {pipeline_mode = #tpu.pipeline_mode<synchronous>, transform_indices = @transform_2, window_bounds = array<i64: 1, 64>}, {pipeline_mode = #tpu.pipeline_mode<synchronous>, transform_indices = @transform_3, window_bounds = array<i64: 64, 64>}, {pipeline_mode = #tpu.pipeline_mode<synchronous>, transform_indices = @transform_4, window_bounds = array<i64: 1, 64>}, {pipeline_mode = #tpu.pipeline_mode<synchronous>, transform_indices = @transform_5, window_bounds = array<i64: 64, 16>}, {pipeline_mode = #tpu.pipeline_mode<synchronous>, transform_indices = @transform_6, window_bounds = array<i64: 1, 16>}, {transform_indices = @transform_7, window_bounds = array<i64: 8, 16>}]} {
    %c0 = arith.constant 0 : index
    %c0_0 = arith.constant 0 : index
    %0 = vector.load %arg1[%c0, %c0_0] : memref<8x32xf32, #tpu.memory_space<vmem>>, vector<8x32xf32>
    %c0_1 = arith.constant 0 : index
    %c0_2 = arith.constant 0 : index
    %1 = vector.load %arg2[%c0_1, %c0_2] : memref<32x64xf32, #tpu.memory_space<vmem>>, vector<32x64xf32>
    %cst = arith.constant dense<0.000000e+00> : vector<8x64xf32>
    %2 = tpu.matmul %0, %1, %cst {dimension_numbers = #tpu.dot_dimension_numbers<[1], [0], [0], [1], [0, 0, 1, 1], [], []>} : vector<8x32xf32>, vector<32x64xf32>, vector<8x64xf32> -> vector<8x64xf32>
    %c0_3 = arith.constant 0 : index
    %c0_4 = arith.constant 0 : index
    %3 = vector.load %arg3[%c0_3, %c0_4] : memref<1x64xf32, #tpu.memory_space<vmem>>, vector<1x64xf32>
    %4 = vector.broadcast %3 : vector<1x64xf32> to vector<8x64xf32>
    %5 = arith.addf %2, %4 : vector<8x64xf32>
    %cst_5 = arith.constant 0.000000e+00 : f32
    %6 = vector.broadcast %cst_5 : f32 to vector<8x64xf32>
    %7 = arith.cmpf oge, %5, %6 : vector<8x64xf32>
    %cst_6 = arith.constant 0.00999999977 : f32
    %8 = vector.broadcast %cst_6 : f32 to vector<8x64xf32>
    %9 = arith.mulf %8, %5 : vector<8x64xf32>
    %10 = arith.select %7, %5, %9 : vector<8x64xi1>, vector<8x64xf32>
    %c0_7 = arith.constant 0 : index
    %c0_8 = arith.constant 0 : index
    %11 = vector.load %arg4[%c0_7, %c0_8] : memref<64x64xf32, #tpu.memory_space<vmem>>, vector<64x64xf32>
    %cst_9 = arith.constant dense<0.000000e+00> : vector<8x64xf32>
    %12 = tpu.matmul %10, %11, %cst_9 {dimension_numbers = #tpu.dot_dimension_numbers<[1], [0], [0], [1], [0, 0, 1, 1], [], []>} : vector<8x64xf32>, vector<64x64xf32>, vector<8x64xf32> -> vector<8x64xf32>
    %c0_10 = arith.constant 0 : index
    %c0_11 = arith.constant 0 : index
    %13 = vector.load %arg5[%c0_10, %c0_11] : memref<1x64xf32, #tpu.memory_space<vmem>>, vector<1x64xf32>
    %14 = vector.broadcast %13 : vector<1x64xf32> to vector<8x64xf32>
    %15 = arith.addf %12, %14 : vector<8x64xf32>
    %cst_12 = arith.constant 0.000000e+00 : f32
    %16 = vector.broadcast %cst_12 : f32 to vector<8x64xf32>
    %17 = arith.cmpf oge, %15, %16 : vector<8x64xf32>
    %cst_13 = arith.constant 0.00999999977 : f32
    %18 = vector.broadcast %cst_13 : f32 to vector<8x64xf32>
    %19 = arith.mulf %18, %15 : vector<8x64xf32>
    %20 = arith.select %17, %15, %19 : vector<8x64xi1>, vector<8x64xf32>
    %c0_14 = arith.constant 0 : index
    %c0_15 = arith.constant 0 : index
    %21 = vector.load %arg6[%c0_14, %c0_15] : memref<64x16xf32, #tpu.memory_space<vmem>>, vector<64x16xf32>
    %cst_16 = arith.constant dense<0.000000e+00> : vector<8x16xf32>
    %22 = tpu.matmul %20, %21, %cst_16 {dimension_numbers = #tpu.dot_dimension_numbers<[1], [0], [0], [1], [0, 0, 1, 1], [], []>} : vector<8x64xf32>, vector<64x16xf32>, vector<8x16xf32> -> vector<8x16xf32>
    %c0_17 = arith.constant 0 : index
    %c0_18 = arith.constant 0 : index
    %23 = vector.load %arg7[%c0_17, %c0_18] : memref<1x16xf32, #tpu.memory_space<vmem>>, vector<1x16xf32>
    %24 = vector.broadcast %23 : vector<1x16xf32> to vector<8x16xf32>
    %25 = arith.addf %22, %24 : vector<8x16xf32>
    %cst_19 = arith.constant 0.000000e+00 : f32
    %26 = vector.broadcast %cst_19 : f32 to vector<8x16xf32>
    %27 = arith.cmpf oge, %25, %26 : vector<8x16xf32>
    %cst_20 = arith.constant 0.00999999977 : f32
    %28 = vector.broadcast %cst_20 : f32 to vector<8x16xf32>
    %29 = arith.mulf %28, %25 : vector<8x16xf32>
    %30 = arith.select %27, %25, %29 : vector<8x16xi1>, vector<8x16xf32>
    %c0_21 = arith.constant 0 : index
    %c0_22 = arith.constant 0 : index
    %31 = vector.load %arg8[%c0_21, %c0_22] : memref<8x16xf32, #tpu.memory_space<vmem>>, vector<8x16xf32>
    tpu.vector_store %arg8[%c0_21, %c0_22], %30 {strides = array<i32>} : memref<8x16xf32, #tpu.memory_space<vmem>>, vector<8x16xf32>,
    return
  }
  func.func @transform_0(%arg0: i32) -> (i32, i32) {
    %c0_i32 = arith.constant 0 : i32
    %c0_i32_0 = arith.constant 0 : i32
    return %arg0, %c0_i32 : i32, i32
  }
  func.func @transform_1(%arg0: i32) -> (i32, i32) {
    %c0_i32 = arith.constant 0 : i32
    %c0_i32_0 = arith.constant 0 : i32
    %c0_i32_1 = arith.constant 0 : i32
    return %c0_i32, %c0_i32_0 : i32, i32
  }
  func.func @transform_2(%arg0: i32) -> (i32, i32) {
    %c0_i32 = arith.constant 0 : i32
    %c0_i32_0 = arith.constant 0 : i32
    %c0_i32_1 = arith.constant 0 : i32
    return %c0_i32, %c0_i32_0 : i32, i32
  }
  func.func @transform_3(%arg0: i32) -> (i32, i32) {
    %c0_i32 = arith.constant 0 : i32
    %c0_i32_0 = arith.constant 0 : i32
    %c0_i32_1 = arith.constant 0 : i32
    return %c0_i32, %c0_i32_0 : i32, i32
  }
  func.func @transform_4(%arg0: i32) -> (i32, i32) {
    %c0_i32 = arith.constant 0 : i32
    %c0_i32_0 = arith.constant 0 : i32
    %c0_i32_1 = arith.constant 0 : i32
    return %c0_i32, %c0_i32_0 : i32, i32
  }
  func.func @transform_5(%arg0: i32) -> (i32, i32) {
    %c0_i32 = arith.constant 0 : i32
    %c0_i32_0 = arith.constant 0 : i32
    %c0_i32_1 = arith.constant 0 : i32
    return %c0_i32, %c0_i32_0 : i32, i32
  }
  func.func @transform_6(%arg0: i32) -> (i32, i32) {
    %c0_i32 = arith.constant 0 : i32
    %c0_i32_0 = arith.constant 0 : i32
    %c0_i32_1 = arith.constant 0 : i32
    return %c0_i32, %c0_i32_0 : i32, i32
  }
  func.func @transform_7(%arg0: i32) -> (i32, i32) {
    %c0_i32 = arith.constant 0 : i32
    %c0_i32_0 = arith.constant 0 : i32
    return %arg0, %c0_i32 : i32, i32
  }
}

</mosaic_0001>

<llo_original>
// kernel: tpu_custom_call.1
$region0: #{tpu_custom_call.1}
  #allocation0 [shape = 'u32[]', space=smem, size = 0x4, offset = 0x4, fixed_abs, tag = 'smem constant byte address 0x4 - core index']
  #allocation1 [shape = 'u32[72,128]{1,0:T(1,128)}', space=vmem, size = 0x9000, scoped, tag = 'internal scratch']
  %s0 = inlined_call_operand.vmem [shape: f32[8,32], index: 0, kind: input, shape index: {}]
  %s1 = inlined_call_operand.hbm [shape: f32[32,64], index: 1, kind: input, shape index: {}]
  %s2 = inlined_call_operand.vmem [shape: f32[1,64], index: 2, kind: input, shape index: {}]
  %s3 = inlined_call_operand.vmem [shape: f32[64,64], index: 3, kind: input, shape index: {}]
  %s4 = inlined_call_operand.vmem [shape: f32[1,64], index: 4, kind: input, shape index: {}]
  %s5 = inlined_call_operand.vmem [shape: f32[64,16], index: 5, kind: input, shape index: {}]
  %s6 = inlined_call_operand.vmem [shape: f32[1,16], index: 6, kind: input, shape index: {}]
  %s7 = inlined_call_operand.hbm [shape: f32[8,16], index: 7, kind: output, shape index: {}]
  %s8 = sld [smem:[#allocation0]]
  $region42: #{tpu_custom_call.1} parent=0
    _
  %s10 = ssub.s32 1, %s8
  %s11 = scalar_select 0, %s10, %s8
  $region1: #{tpu_custom_call.1} parent=0
    #allocation2 [shape = 'u8[16384]{0}', space=vmem, size = 0x4000, scoped, tag = 'input window, operand 1, single buffered']
    #allocation3 [shape = 's32[1]{0}', space=sflag, size = 0x4, scoped, tag = 'scoped memory for tpu_custom_call.1']
    #allocation4 [shape = 's32[1]{0}', space=sflag, size = 0x4, scoped, tag = 'scoped memory for tpu_custom_call.1']
    #allocation5 [shape = 'u8[4096]{0}', space=vmem, size = 0x1000, scoped, tag = 'output window, operand 0, single buffered']
    %12 = vsyncpa [#allocation3], 0
    %13 = vsyncpa [#allocation4], 0
    // Predicated region
    $region2: #{tpu_custom_call.1} parent=1 // pred_check
      _
    $region3: #{tpu_custom_call.1} parent=1 // pred_check_branch
      %15 = sbr.rel (0) target = $region5
    $region4: #{tpu_custom_call.1} parent=1 // pred_region
      _
    $region5: #{tpu_custom_call.1} parent=1 // pred_fallthru
      _
    // Predicated region
    $region6: #{tpu_custom_call.1} parent=1 // pred_check
      _
    $region7: #{tpu_custom_call.1} parent=1 // pred_check_branch
      %17 = sbr.rel (0) target = $region9
    $region8: #{tpu_custom_call.1} parent=1 // pred_region
      %19 = vsyncadd [#allocation3], 0
      %s20 = sshll.u32 %s1, 4
      %s21 = int_to_ptr.hbm [resolvable:$true] %s20
      %s22 = sshll.u32 [#allocation2], 4
      %s23 = int_to_ptr.vmem [resolvable:$true] %s22
      %28 = dma.hbm_to_vmem [thread:$0]  %s21, 512, %s23, [#allocation3], 128, 128, 8
    $region9: #{tpu_custom_call.1} parent=1 // pred_fallthru
      _
    // Predicated region
    $region10: #{tpu_custom_call.1} parent=1 // pred_check
      _
    $region11: #{tpu_custom_call.1} parent=1 // pred_check_branch
      %30 = sbr.rel (0) target = $region13
    $region12: #{tpu_custom_call.1} parent=1 // pred_region
      _
    $region13: #{tpu_custom_call.1} parent=1 // pred_fallthru
      _
    // Predicated region
    $region14: #{tpu_custom_call.1} parent=1 // pred_check
      _
    $region15: #{tpu_custom_call.1} parent=1 // pred_check_branch
      %32 = sbr.rel (0) target = $region17
    $region16: #{tpu_custom_call.1} parent=1 // pred_region
      _
    $region17: #{tpu_custom_call.1} parent=1 // pred_fallthru
      _
    // Predicated region
    $region18: #{tpu_custom_call.1} parent=1 // pred_check
      _
    $region19: #{tpu_custom_call.1} parent=1 // pred_check_branch
      %34 = sbr.rel (0) target = $region21
    $region20: #{tpu_custom_call.1} parent=1 // pred_region
      _
    $region21: #{tpu_custom_call.1} parent=1 // pred_fallthru
      _
    // Predicated region
    $region22: #{tpu_custom_call.1} parent=1 // pred_check
      _
    $region23: #{tpu_custom_call.1} parent=1 // pred_check_branch
      %36 = sbr.rel (0) target = $region25
    $region24: #{tpu_custom_call.1} parent=1 // pred_region
      _
    $region25: #{tpu_custom_call.1} parent=1 // pred_fallthru
      _
    // Predicated region
    $region26: #{tpu_custom_call.1} parent=1 // pred_check
      _
    $region27: #{tpu_custom_call.1} parent=1 // pred_check_branch
      %38 = sbr.rel (0) target = $region29
    $region28: #{tpu_custom_call.1} parent=1 // pred_region
      _
    $region29: #{tpu_custom_call.1} parent=1 // pred_fallthru
      _
    // Predicated region
    $region30: #{tpu_custom_call.1} parent=1 // pred_check
      _
    $region31: #{tpu_custom_call.1} parent=1 // pred_check_branch
      %40 = sbr.rel (0) target = $region33
    $region32: #{tpu_custom_call.1} parent=1 // pred_region
      %42 = dma.done [#allocation3], 512
    $region33: #{tpu_custom_call.1} parent=1 // pred_fallthru
      _
    %v43 = vld [vmem:[%s0] sm:$0xff]
    %v44 = vld [vmem:[#allocation2] sm:$0xff]
    %v45 = vld [vmem:[#allocation2 + $0x8] sm:$0xff]
    %v46 = vld [vmem:[#allocation2 + $0x10] sm:$0xff]
    %v47 = vld [vmem:[#allocation2 + $0x18] sm:$0xff]
    %v48 = vld [vmem:[%s2] sm:$0x1]
    %v50 = vperm.slane %v48, 0
    %vm52 = vcmask 261120
    %v54 = vsel %vm52, %v43, 0
    %56 = vmatpush.msra.mxu0 0.0
    %57 = vmatpush.msra.mxu0 0.0
    %58 = vmatpush.msra.mxu0 0.0
    %59 = vmatpush.msra.mxu0 0.0
    %60 = vmatpush.msra.mxu0 0.0
    %61 = vmatpush.msra.mxu0 0.0
    %62 = vmatpush.msra.mxu0 0.0
    %63 = vmatpush.msra.mxu0 0.0
    %64 = vmatpush.msra.mxu0 0.0
    %65 = vmatpush.msra.mxu0 0.0
    %66 = vmatpush.msra.mxu0 0.0
    %67 = vmatpush.msra.mxu0 0.0
    %68 = vmatpush.msra.mxu0 %v47
    %69 = vmatpush.msra.mxu0 %v46
    %70 = vmatpush.msra.mxu0 %v45
    %71 = vmatpush.msra.mxu0 %v44
    %72 = vmatmul.f32.gmra.mxu0 %v54
    %v73 = vpop.f32.mrf.mxu0
    %v74 = vadd.f32 %v50, %v73
    %75 = vdwg.mxu0
    %vm76 = vcmp.ge.f32.partialorder %v74, 0.0
    %v77 = vmul.f32 %v74, 0.01
    %v78 = vsel %vm76, %v74, %v77
    %v79 = vld [vmem:[%s3] sm:$0xff]
    %v80 = vld [vmem:[%s3 + $0x8] sm:$0xff]
    %v81 = vld [vmem:[%s3 + $0x10] sm:$0xff]
    %v82 = vld [vmem:[%s3 + $0x18] sm:$0xff]
    %v83 = vld [vmem:[%s3 + $0x20] sm:$0xff]
    %v84 = vld [vmem:[%s3 + $0x28] sm:$0xff]
    %v85 = vld [vmem:[%s3 + $0x30] sm:$0xff]
    %v86 = vld [vmem:[%s3 + $0x38] sm:$0xff]
    %v87 = vld [vmem:[%s4] sm:$0x1]
    %v89 = vperm.slane %v87, 0
    %vm91 = vcmask 523264
    %v93 = vsel %vm91, %v78, 0
    %95 = vmatpush.msra.mxu0 0.0
    %96 = vmatpush.msra.mxu0 0.0
    %97 = vmatpush.msra.mxu0 0.0
    %98 = vmatpush.msra.mxu0 0.0
    %99 = vmatpush.msra.mxu0 0.0
    %100 = vmatpush.msra.mxu0 0.0
    %101 = vmatpush.msra.mxu0 0.0
    %102 = vmatpush.msra.mxu0 0.0
    %103 = vmatpush.msra.mxu0 %v86
    %104 = vmatpush.msra.mxu0 %v85
    %105 = vmatpush.msra.mxu0 %v84
    %106 = vmatpush.msra.mxu0 %v83
    %107 = vmatpush.msra.mxu0 %v82
    %108 = vmatpush.msra.mxu0 %v81
    %109 = vmatpush.msra.mxu0 %v80
    %110 = vmatpush.msra.mxu0 %v79
    %111 = vmatmul.f32.gmra.mxu0 %v93
    %v112 = vpop.f32.mrf.mxu0
    %v113 = vadd.f32 %v89, %v112
    %114 = vdwg.mxu0
    %vm115 = vcmp.ge.f32.partialorder %v113, 0.0
    %v116 = vmul.f32 %v113, 0.01
    %v117 = vsel %vm115, %v113, %v116
    %v118 = vld [vmem:[%s5] sm:$0xff]
    %v119 = vld [vmem:[%s5 + $0x8] sm:$0xff]
    %v120 = vld [vmem:[%s5 + $0x10] sm:$0xff]
    %v121 = vld [vmem:[%s5 + $0x18] sm:$0xff]
    %v122 = vld [vmem:[%s5 + $0x20] sm:$0xff]
    %v123 = vld [vmem:[%s5 + $0x28] sm:$0xff]
    %v124 = vld [vmem:[%s5 + $0x30] sm:$0xff]
    %v125 = vld [vmem:[%s5 + $0x38] sm:$0xff]
    %v126 = vld [vmem:[%s6] sm:$0x1]
    %v128 = vperm.slane %v126, 0
    %v131 = vsel %vm91, %v117, 0
    %133 = vmatpush.msra.mxu0 0.0
    %134 = vmatpush.msra.mxu0 0.0
    %135 = vmatpush.msra.mxu0 0.0
    %136 = vmatpush.msra.mxu0 0.0
    %137 = vmatpush.msra.mxu0 0.0
    %138 = vmatpush.msra.mxu0 0.0
    %139 = vmatpush.msra.mxu0 0.0
    %140 = vmatpush.msra.mxu0 0.0
    %141 = vmatpush.msra.mxu0 %v125
    %142 = vmatpush.msra.mxu0 %v124
    %143 = vmatpush.msra.mxu0 %v123
    %144 = vmatpush.msra.mxu0 %v122
    %145 = vmatpush.msra.mxu0 %v121
    %146 = vmatpush.msra.mxu0 %v120
    %147 = vmatpush.msra.mxu0 %v119
    %148 = vmatpush.msra.mxu0 %v118
    %149 = vmatmul.f32.gmra.mxu0 %v131
    %v150 = vpop.f32.mrf.mxu0
    %v151 = vadd.f32 %v128, %v150
    %152 = vdwg.mxu0
    %vm153 = vcmp.ge.f32.partialorder %v151, 0.0
    %v154 = vmul.f32 %v151, 0.01
    %v155 = vsel %vm153, %v151, %v154
    %vm156 = vcmask 130048
    %157 = vst.msk [vmem:[#allocation5] sm:$0xff] %vm156, %v155
    // Predicated region
    $region34: #{tpu_custom_call.1} parent=1 // pred_check
      _
    $region35: #{tpu_custom_call.1} parent=1 // pred_check_branch
      %159 = sbr.rel (0) target = $region37
    $region36: #{tpu_custom_call.1} parent=1 // pred_region
      %161 = vsyncadd [#allocation4], 0
      %s163 = sshll.u32 [#allocation5], 4
      %s164 = int_to_ptr.vmem [resolvable:$true] %s163
      %s165 = sshll.u32 %s7, 4
      %s166 = int_to_ptr.hbm [resolvable:$true] %s165
      %168 = dma.vmem_to_hbm [thread:$0]  %s164, 128, %s166, [#allocation4]
    $region37: #{tpu_custom_call.1} parent=1 // pred_fallthru
      _
    // Predicated region
    $region38: #{tpu_custom_call.1} parent=1 // pred_check
      _
    $region39: #{tpu_custom_call.1} parent=1 // pred_check_branch
      %170 = sbr.rel (0) target = $region41
    $region40: #{tpu_custom_call.1} parent=1 // pred_region
      %172 = dma.done [#allocation4], 128
    $region41: #{tpu_custom_call.1} parent=1 // pred_fallthru
      _
    %173 = vsyncpa [#allocation3], 1
    %174 = vsyncpa [#allocation4], 1

</llo_original>
